<compile_context>
chip_gen: v7x
topology: tpu7x:2x2x1
jax: 0.10.0
libtpu: 0.0.40
codegen_flags: <defaults>
</compile_context>

<pallas_src>
import jax
import jax.numpy as jnp
from jax.experimental import pallas as pl
from jax.experimental.pallas import tpu as pltpu

_LANES = 128


def _gish_kernel(x_ref, o_ref):
    # x_ref / o_ref: (tile_rows, 128) VMEM tiles.  Elementwise Gish; math in
    # f32 so bf16/fp16 inputs still get f32 transcendentals on the EUP.
    x = x_ref[...].astype(jnp.float32)
    y = x * jnp.log(2.0 - jnp.exp(-jnp.exp(x)))
    o_ref[...] = y.astype(o_ref.dtype)


def _gish_tail(x_flat):
    # Plain-jnp fallback for the <128-element ragged tail (same formula).
    xf = x_flat.astype(jnp.float32)
    return (xf * jnp.log(2.0 - jnp.exp(-jnp.exp(xf)))).astype(x_flat.dtype)


def _sublane_multiple(dtype) -> int:
    # Minimum sublane tile per dtype: 8 rows (f32), 16 (bf16/fp16), 32 (8-bit).
    itemsize = jnp.dtype(dtype).itemsize
    return max(8, 8 * (4 // max(1, itemsize)))


def _gish_2d(x2d, tile_rows):
    """Run the Gish kernel on a lane-dense (rows, 128) slab."""
    rows, lanes = x2d.shape
    mult = _sublane_multiple(x2d.dtype)

    # Block rows: as large as requested, aligned to the dtype's sublane tile.
    tr = max(mult, (int(tile_rows) // mult) * mult)
    if rows <= tr:
        # Split into >=2 blocks when possible so the 1-D "parallel" grid can
        # shard across both TensorCores on multi-TC chips (v7x).
        half = -(-rows // 2)            # ceil(rows / 2)
        half = -(-half // mult) * mult  # round up to sublane multiple
        tr = max(mult, min(half, tr))

    grid = (pl.cdiv(rows, tr),)  # partial last block is masked by Pallas
    n = rows * lanes
    itemsize = jnp.dtype(x2d.dtype).itemsize

    return pl.pallas_call(
        _gish_kernel,
        out_shape=jax.ShapeDtypeStruct((rows, lanes), x2d.dtype),
        grid_spec=pltpu.PrefetchScalarGridSpec(
            num_scalar_prefetch=0,
            grid=grid,
            in_specs=[pl.BlockSpec((tr, lanes), lambda i: (i, 0))],
            out_specs=pl.BlockSpec((tr, lanes), lambda i: (i, 0)),
        ),
        compiler_params=pltpu.CompilerParams(
            dimension_semantics=("parallel",),
            vmem_limit_bytes=32 << 20,
        ),
        cost_estimate=pl.CostEstimate(
            flops=5 * n,
            transcendentals=3 * n,
            bytes_accessed=2 * n * itemsize,
        ),
    )(x2d)


def gish(x, *, tile_rows=8192):
    """Applies Gish elementwise; returns an array with the same shape/dtype as x."""
    orig_shape = x.shape

    flat = x.reshape(-1)
    n = flat.shape[0]
    if n == 0:
        return x

    tail = n % _LANES
    prefix_n = n - tail

    if tail == 0:
        # Fast path: zero-copy reshape to (rows, 128), no padding anywhere.
        out_flat = _gish_2d(flat.reshape(prefix_n // _LANES, _LANES),
                            tile_rows).reshape(-1)
    elif prefix_n == 0:
        # Tiny (<128-element) input: not worth a kernel launch.
        out_flat = _gish_tail(flat)
    else:
        # Unaligned size: kernel on the aligned prefix, plain jnp on the
        # <128-element ragged tail (no full-array pad / slice-back round trip).
        head = _gish_2d(flat[:prefix_n].reshape(prefix_n // _LANES, _LANES),
                        tile_rows).reshape(-1)
        out_flat = jnp.concatenate([head, _gish_tail(flat[prefix_n:])])

    return out_flat.reshape(orig_shape)


def _gish_reference(x):
    xf = x.astype(jnp.float32)
    return (xf * jnp.log(2.0 - jnp.exp(-jnp.exp(xf)))).astype(x.dtype)


if __name__ == "__main__":
    key = jax.random.PRNGKey(0)

    # Small NCHW-style activation input (2*4*16*16 = 2048 elements -> aligned
    # fast path, grid of 2 blocks).
    x = jax.random.normal(key, (2, 4, 16, 16), dtype=jnp.float32)
    out = jax.block_until_ready(gish(x))
    assert out.shape == x.shape and out.dtype == x.dtype
    assert jnp.allclose(out, _gish_reference(x), atol=1e-5, rtol=1e-5)

    # Unaligned size with an aligned prefix (1005 = 7*128 + 109): exercises the
    # partial-last-block kernel path plus the ragged-tail jnp path.
    x_odd = jax.random.normal(jax.random.PRNGKey(1), (3, 5, 67), dtype=jnp.float32)
    out_odd = jax.block_until_ready(gish(x_odd))
    assert out_odd.shape == x_odd.shape
    assert jnp.allclose(out_odd, _gish_reference(x_odd), atol=1e-5, rtol=1e-5)

    # Tiny (<128 element) input: pure-jnp fallback path.
    x_tiny = jax.random.normal(jax.random.PRNGKey(2), (3, 5, 7), dtype=jnp.float32)
    out_tiny = jax.block_until_ready(gish(x_tiny))
    assert jnp.allclose(out_tiny, _gish_reference(x_tiny), atol=1e-5, rtol=1e-5)

    # bf16 input: exercises the 16-row sublane-tile alignment.
    x_bf16 = jax.random.normal(jax.random.PRNGKey(3), (2, 4, 16, 16),
                               dtype=jnp.bfloat16)
    out_bf16 = jax.block_until_ready(gish(x_bf16))
    assert out_bf16.dtype == jnp.bfloat16 and out_bf16.shape == x_bf16.shape
    assert jnp.allclose(out_bf16.astype(jnp.float32),
                        _gish_reference(x_bf16).astype(jnp.float32),
                        atol=5e-2, rtol=5e-2)

    print("KERNEL_OK")
</pallas_src>

<mosaic_0001>
module attributes {stable_mosaic.version = 11 : i64} {
  func.func @_gish_kernel(%arg0: i32, %arg1: memref<8x128xf32, #tpu.memory_space<vmem>>, %arg2: memref<8x128xf32, #tpu.memory_space<vmem>>) attributes {dimension_semantics = [#tpu.dimension_semantics<parallel>], iteration_bounds = array<i64: 2>, scalar_prefetch = 0 : i64, scratch_operands = 0 : i64, tpu.core_type = #tpu.core_type<tc>, window_params = [{transform_indices = @transform_0, window_bounds = array<i64: 8, 128>}, {transform_indices = @transform_1, window_bounds = array<i64: 8, 128>}]} {
    %c0 = arith.constant 0 : index
    %c0_0 = arith.constant 0 : index
    %0 = vector.load %arg1[%c0, %c0_0] : memref<8x128xf32, #tpu.memory_space<vmem>>, vector<8x128xf32>
    %1 = math.exp %0 : vector<8x128xf32>
    %cst = arith.constant 0.000000e+00 : f32
    %2 = vector.broadcast %cst : f32 to vector<8x128xf32>
    %3 = arith.subf %2, %1 : vector<8x128xf32>
    %4 = math.exp %3 : vector<8x128xf32>
    %cst_1 = arith.constant 2.000000e+00 : f32
    %5 = vector.broadcast %cst_1 : f32 to vector<8x128xf32>
    %6 = arith.subf %5, %4 : vector<8x128xf32>
    %7 = math.log %6 : vector<8x128xf32>
    %8 = arith.mulf %0, %7 : vector<8x128xf32>
    %c0_2 = arith.constant 0 : index
    %c0_3 = arith.constant 0 : index
    %9 = vector.load %arg2[%c0_2, %c0_3] : memref<8x128xf32, #tpu.memory_space<vmem>>, vector<8x128xf32>
    tpu.vector_store %arg2[%c0_2, %c0_3], %8 {strides = array<i32>} : memref<8x128xf32, #tpu.memory_space<vmem>>, vector<8x128xf32>,
    return
  }
  func.func @transform_0(%arg0: i32) -> (i32, i32) {
    %c0_i32 = arith.constant 0 : i32
    %c0_i32_0 = arith.constant 0 : i32
    return %arg0, %c0_i32 : i32, i32
  }
  func.func @transform_1(%arg0: i32) -> (i32, i32) {
    %c0_i32 = arith.constant 0 : i32
    %c0_i32_0 = arith.constant 0 : i32
    return %arg0, %c0_i32 : i32, i32
  }
}

</mosaic_0001>

<llo_original>
// kernel: tpu_custom_call.1
$region0: #{tpu_custom_call.1}
  #allocation0 [shape = 'u32[]', space=smem, size = 0x4, offset = 0x4, fixed_abs, tag = 'smem constant byte address 0x4 - core index']
  #allocation1 [shape = 'u32[144,128]{1,0:T(1,128)}', space=vmem, size = 0x12000, scoped, tag = 'internal scratch']
  %s0 = inlined_call_operand.hbm [shape: f32[16,128], index: 0, kind: input, shape index: {}]
  %s1 = inlined_call_operand.hbm [shape: f32[16,128], index: 1, kind: output, shape index: {}]
  %s2 = sld [smem:[#allocation0]]
  $region41: #{tpu_custom_call.1} parent=0
    _
  %s4 = ssub.s32 1, %s2
  %s5 = scalar_select 0, %s4, %s2
  $region1: #{tpu_custom_call.1} parent=0
    #allocation2 [shape = 'u8[8192]{0}', space=vmem, size = 0x2000, scoped, tag = 'input window, operand 0']
    #allocation3 [shape = 's32[2]{0}', space=sflag, size = 0x8, scoped, tag = 'scoped memory for tpu_custom_call.1']
    #allocation4 [shape = 's32[2]{0}', space=sflag, size = 0x8, scoped, tag = 'scoped memory for tpu_custom_call.1']
    #allocation5 [shape = 'u8[8192]{0}', space=vmem, size = 0x2000, scoped, tag = 'output window, operand 0']
    %6 = vsyncpa [#allocation3], 0
    %s7 = scalar_lea.sflag [#allocation3], 1
    %8 = vsyncpa %s7, 0
    %9 = vsyncpa [#allocation4], 0
    %s10 = scalar_lea.sflag [#allocation4], 1
    %11 = vsyncpa %s10, 0
    loop: start=0, step=1, limit=4
    $region2: #{tpu_custom_call.1} parent=1 // loop_pre_header
      _
    $region3: #{tpu_custom_call.1} parent=1 // loop_header
      %s13 = sphi 0, %s17
      %p14 = scmp.ge.s32.totalorder %s13, 4
      %s23 = sphi 0, %s25
      %s26 = sphi 0, %s23
      %s27 = sphi 0, %s26
      %s43 = sphi 0, %s27
      %s49 = sphi 0, %s51
      %s52 = sphi 0, %s49
      %s53 = sphi 0, %s52
      %s69 = sphi 0, %s53
    $region4: #{tpu_custom_call.1} parent=1 // loop_header_branch
      %16 = sbr.rel (%p14) target = $region8
    $region5: #{tpu_custom_call.1} parent=1 // loop_body
      %s18 = ssub.s32 %s13, 1
      %s19 = ssub.s32 %s13, 2
      %s20 = sadd.s32 %s13, 1
      %s21 = ssub.s32 %s13, %s20
      %p22 = scmp.eq.s32.totalorder %s21, 0
      %s24 = sadd.s32 %s23, 1
      %s25 = scalar_select %p22, %s23, %s24
      %p28 = pneg %p22
      %p29 = scmp.eq.s32.totalorder %s13, 1
      %p30 = por %p28, %p29
      %p31 = scmp.ne.s32.totalorder %s23, %s26
      %p32 = scmp.eq.s32.totalorder %s13, 0
      %p33 = por %p31, %p32
      %p34 = scmp.ne.s32.totalorder %s23, %s26
      %p35 = scmp.eq.s32.totalorder %s18, 1
      %p36 = por %p34, %p35
      %p37 = scmp.ne.s32.totalorder %s26, %s27
      %p38 = scmp.eq.s32.totalorder %s18, 0
      %p39 = por %p37, %p38
      %p40 = scmp.ne.s32.totalorder %s26, %s27
      %p41 = scmp.eq.s32.totalorder %s19, 1
      %p42 = por %p40, %p41
      %p44 = scmp.ne.s32.totalorder %s27, %s43
      %p45 = scmp.eq.s32.totalorder %s19, 0
      %p46 = por %p44, %p45
      %s47 = ssub.s32 %s13, %s20
      %p48 = scmp.eq.s32.totalorder %s47, 0
      %s50 = sadd.s32 %s49, 1
      %s51 = scalar_select %p48, %s49, %s50
      %p54 = pneg %p48
      %p55 = scmp.eq.s32.totalorder %s13, 1
      %p56 = por %p54, %p55
      %p57 = scmp.ne.s32.totalorder %s49, %s52
      %p58 = scmp.eq.s32.totalorder %s13, 0
      %p59 = por %p57, %p58
      %p60 = scmp.ne.s32.totalorder %s49, %s52
      %p61 = scmp.eq.s32.totalorder %s18, 1
      %p62 = por %p60, %p61
      %p63 = scmp.ne.s32.totalorder %s52, %s53
      %p64 = scmp.eq.s32.totalorder %s18, 0
      %p65 = por %p63, %p64
      %p66 = scmp.ne.s32.totalorder %s52, %s53
      %p67 = scmp.eq.s32.totalorder %s19, 1
      %p68 = por %p66, %p67
      %p70 = scmp.ne.s32.totalorder %s53, %s69
      %p71 = scmp.eq.s32.totalorder %s19, 0
      %p72 = por %p70, %p71
      %p73 = scmp.le.s32.totalorder 1, %s13
      %p74 = scmp.lt.s32.totalorder %s13, 3
      %p75 = pnand %p73, %p74
      %p76 = pneg %p75
      // Predicated region
      $region9: #{tpu_custom_call.1} parent=5 // pred_check
        _
      $region10: #{tpu_custom_call.1} parent=5 // pred_check_branch
        %78 = sbr.rel (%p75) target = $region12
      $region11: #{tpu_custom_call.1} parent=5 // pred_region
        %s79 = ssub.s32 %s13, 1
      $region12: #{tpu_custom_call.1} parent=5 // pred_fallthru
        _
      %p80 = scmp.lt.s32.totalorder %s13, 2
      // Predicated region
      $region13: #{tpu_custom_call.1} parent=5 // pred_check
        %p81 = pneg %p80
      $region14: #{tpu_custom_call.1} parent=5 // pred_check_branch
        %83 = sbr.rel (%p81) target = $region16
      $region15: #{tpu_custom_call.1} parent=5 // pred_region
        // Predicated region
        $region17: #{tpu_custom_call.1} parent=15 // pred_check
          %p84 = pneg %p33
        $region18: #{tpu_custom_call.1} parent=15 // pred_check_branch
          %86 = sbr.rel (%p84) target = $region20
        $region19: #{tpu_custom_call.1} parent=15 // pred_region
          %s87 = sand.u32 %s23, 1
          %s88 = scalar_lea.sflag [#allocation3], %s87
          %s89 = sand.u32 %s23, 1
          %s90 = smul.addr %s89, 8
          %s91 = scalar_lea.vmem [#allocation2], %s90
          %s93 = ssub.s32 128, 128
          %94 = vsyncadd %s88, %s93
          %s95 = smul.addr %s13, 128
          %s96 = scalar_lea.hbm %s0, %s95
          %s98 = sshll.u32 %s91, 4
          %s99 = int_to_ptr.vmem [resolvable:$true] %s98
          %101 = dma.hbm_to_vmem [thread:$0]  %s96, 128, %s99, %s88
        $region20: #{tpu_custom_call.1} parent=15 // pred_fallthru
          _
      $region16: #{tpu_custom_call.1} parent=5 // pred_fallthru
        _
      %p102 = scmp.le.s32.totalorder 1, %s13
      %p103 = scmp.lt.s32.totalorder %s13, 3
      %p104 = pnand %p102, %p103
      %p105 = pneg %p104
      // Predicated region
      $region21: #{tpu_custom_call.1} parent=5 // pred_check
        _
      $region22: #{tpu_custom_call.1} parent=5 // pred_check_branch
        %107 = sbr.rel (%p104) target = $region24
      $region23: #{tpu_custom_call.1} parent=5 // pred_region
        %s108 = ssub.s32 %s13, 1
        %s109 = sand.u32 %s26, 1
        %s110 = scalar_lea.sflag [#allocation3], %s109
        %s111 = sand.u32 %s26, 1
        %s112 = smul.addr %s111, 8
        %s113 = scalar_lea.vmem [#allocation2], %s112
        // Predicated region
        $region25: #{tpu_custom_call.1} parent=23 // pred_check
          %p114 = pneg %p39
        $region26: #{tpu_custom_call.1} parent=23 // pred_check_branch
          %116 = sbr.rel (%p114) target = $region28
        $region27: #{tpu_custom_call.1} parent=23 // pred_region
          %117 = dma.done %s110, 128
        $region28: #{tpu_custom_call.1} parent=23 // pred_fallthru
          _
        %s118 = sand.u32 %s26, 1
        %s119 = scalar_lea.sflag [#allocation3], %s118
        %s120 = sand.u32 %s26, 1
        %s121 = smul.addr %s120, 8
        %s122 = scalar_lea.vmem [#allocation2], %s121
        %p123 = pneg %p39
        %p124 = pneg %p36
        %p125 = pneg %p65
        %p126 = pneg %p62
        %s127 = sand.u32 %s52, 1
        %s128 = scalar_lea.sflag [#allocation4], %s127
        %s129 = sand.u32 %s52, 1
        %s130 = smul.addr %s129, 8
        %s131 = scalar_lea.vmem [#allocation5], %s130
        %v132 = vld [vmem:[%s113] sm:$0xff]
        %v133 = vmul.f32 %v132, 1.442695
        %v134 = vpow.pop %v133
        %v135 = vsub.f32 0.0, %v134
        %v136 = vmul.f32 %v135, 1.442695
        %v137 = vpow.pop %v136
        %v138 = vsub.f32 2.0, %v137
        %v139 = vlog2.pop %v138
        %v140 = vmul.f32 %v139, 0.6931472
        %v141 = vmul.f32 %v132, %v140
        %142 = vst [vmem:[%s131] sm:$0xff] %v141
        %s143 = sand.u32 %s52, 1
        %s144 = scalar_lea.sflag [#allocation4], %s143
        %s145 = sand.u32 %s52, 1
        %s146 = smul.addr %s145, 8
        %s147 = scalar_lea.vmem [#allocation5], %s146
        // Predicated region
        $region29: #{tpu_custom_call.1} parent=23 // pred_check
          %p148 = pneg %p62
        $region30: #{tpu_custom_call.1} parent=23 // pred_check_branch
          %150 = sbr.rel (%p148) target = $region32
        $region31: #{tpu_custom_call.1} parent=23 // pred_region
          %s152 = ssub.s32 128, 128
          %153 = vsyncadd %s144, %s152
          %s154 = smul.addr %s18, 128
          %s155 = scalar_lea.hbm %s1, %s154
          %s157 = sshll.u32 %s147, 4
          %s158 = int_to_ptr.vmem [resolvable:$true] %s157
          %160 = dma.vmem_to_hbm [thread:$0]  %s158, 128, %s155, %s144
        $region32: #{tpu_custom_call.1} parent=23 // pred_fallthru
          _
      $region24: #{tpu_custom_call.1} parent=5 // pred_fallthru
        _
      %p161 = scmp.le.s32.totalorder 2, %s13
      // Predicated region
      $region33: #{tpu_custom_call.1} parent=5 // pred_check
        %p162 = pneg %p161
      $region34: #{tpu_custom_call.1} parent=5 // pred_check_branch
        %164 = sbr.rel (%p162) target = $region36
      $region35: #{tpu_custom_call.1} parent=5 // pred_region
        %s165 = ssub.s32 %s13, 2
        // Predicated region
        $region37: #{tpu_custom_call.1} parent=35 // pred_check
          %p166 = pneg %p68
        $region38: #{tpu_custom_call.1} parent=35 // pred_check_branch
          %168 = sbr.rel (%p166) target = $region40
        $region39: #{tpu_custom_call.1} parent=35 // pred_region
          %s169 = sand.u32 %s53, 1
          %s170 = scalar_lea.sflag [#allocation4], %s169
          %s171 = sand.u32 %s53, 1
          %s172 = smul.addr %s171, 8
          %s173 = scalar_lea.vmem [#allocation5], %s172
          %174 = dma.done %s170, 128
        $region40: #{tpu_custom_call.1} parent=35 // pred_fallthru
          _
      $region36: #{tpu_custom_call.1} parent=5 // pred_fallthru
        _
    $region6: #{tpu_custom_call.1} parent=1 // loop_footer
      %s17 = sadd.s32 1, %s13
    $region7: #{tpu_custom_call.1} parent=1 // loop_footer_branch
      %12 = sbr.rel target = $region3
    $region8: #{tpu_custom_call.1} parent=1 // loop_exit
      _
    %175 = vsyncpa [#allocation3], 1
    %s176 = scalar_lea.sflag [#allocation3], 1
    %177 = vsyncpa %s176, 1
    %178 = vsyncpa [#allocation4], 1
    %s179 = scalar_lea.sflag [#allocation4], 1
    %180 = vsyncpa %s179, 1

</llo_original>
